<compile_context>
chip_gen: v7x
topology: tpu7x:2x2x1
jax: 0.10.0
libtpu: 0.0.40
codegen_flags: <defaults>
</compile_context>

<pallas_src>
import math
from functools import partial

import jax
import jax.numpy as jnp
from jax.experimental import pallas as pl
from jax.experimental.pallas import tpu as pltpu


def _round_up(x, m):
    return ((x + m - 1) // m) * m


def _sdp_score_kernel(q_ref, k_ref, o_ref, acc_ref, *, inv_sqrt_d):
    # q_ref: (Bt, tq, td), k_ref: (Bt, tk, td), o_ref: (Bt, tq, tk)
    kd = pl.program_id(3)

    @pl.when(kd == 0)
    def _():
        acc_ref[...] = jnp.zeros_like(acc_ref)

    # Fold the scale into Q before the MXU contraction (tq*td work << tq*tk
    # for typical attention shapes, and it keeps the epilogue store-bound path
    # free of extra VPU work).
    q = q_ref[...] * inv_sqrt_d          # (Bt, tq, td)
    k = k_ref[...]                        # (Bt, tk, td)

    # Batched Q @ K^T over the D-chunk, f32 accumulation on the MXU.
    acc_ref[...] += jax.lax.dot_general(
        q, k,
        dimension_numbers=(((2,), (2,)), ((0,), (0,))),  # contract D, batch B
        preferred_element_type=jnp.float32,
    )

    @pl.when(kd == pl.num_programs(3) - 1)
    def _():
        o_ref[...] = acc_ref[...].astype(o_ref.dtype)


def scaled_dot_product_score(queries, keys, *,
                             tq_max=256, tk_max=256, td_max=256, bt_max=8):
    """queries: [B, NQ, D], keys: [B, NK, D] -> [B, NQ, NK]."""
    B, NQ, D = queries.shape
    Bk, NK, Dk = keys.shape
    assert B == Bk and D == Dk
    inv_sqrt_d = 1.0 / math.sqrt(D)      # scale uses the *real* D (torch semantics)

    # Tile sizes: sublane dims multiples of 8, lane dims multiples of 128.
    # tk (output last dim) is forced to a multiple of 128 -> lane-dense stores.
    tq = min(tq_max, _round_up(NQ, 8))
    tk = min(tk_max, _round_up(NK, 128))
    td = min(td_max, _round_up(D, 128))

    NQp = _round_up(NQ, tq)
    NKp = _round_up(NK, tk)
    Dp = _round_up(D, td)

    # Group several batches per grid step when the per-batch work is tiny.
    if NQp * NKp * Dp <= 256 * 256 * 256:
        Bt = min(B, bt_max)
    else:
        Bt = 1
    Bp = _round_up(B, Bt)

    # Zero-padding is exact: padded D contributes 0 to the dot product; padded
    # NQ/NK rows/cols and padded batches are sliced off below.
    qp = jnp.pad(queries, ((0, Bp - B), (0, NQp - NQ), (0, Dp - D)))
    kp = jnp.pad(keys,    ((0, Bp - B), (0, NKp - NK), (0, Dp - D)))

    grid = (Bp // Bt, NQp // tq, NKp // tk, Dp // td)

    kernel = partial(_sdp_score_kernel, inv_sqrt_d=inv_sqrt_d)

    out = pl.pallas_call(
        kernel,
        out_shape=jax.ShapeDtypeStruct((Bp, NQp, NKp), queries.dtype),
        grid_spec=pltpu.PrefetchScalarGridSpec(
            num_scalar_prefetch=0,
            grid=grid,
            in_specs=[
                pl.BlockSpec((Bt, tq, td), lambda b, i, j, kd: (b, i, kd)),
                pl.BlockSpec((Bt, tk, td), lambda b, i, j, kd: (b, j, kd)),
            ],
            # Output block is invariant along kd -> stays resident in VMEM
            # across the reduction (accumulator pattern).
            out_specs=pl.BlockSpec((Bt, tq, tk), lambda b, i, j, kd: (b, i, j)),
            scratch_shapes=[pltpu.VMEM((Bt, tq, tk), jnp.float32)],
        ),
        compiler_params=pltpu.CompilerParams(
            dimension_semantics=("parallel", "parallel", "parallel", "arbitrary"),
            vmem_limit_bytes=32 * 1024 * 1024,  # explicit; tiles sized to fit all gens
        ),
    )(qp, kp)

    return out[:B, :NQ, :NK]


if __name__ == "__main__":
    key = jax.random.PRNGKey(0)
    kq, kk, kq2, kk2 = jax.random.split(key, 4)

    # Shapes implied by the module's forward (small test case).
    batch, num_queries, num_objects, dim = 2, 8, 8, 32
    queries = jax.random.normal(kq, (batch, num_queries, dim), dtype=jnp.float32)
    keys = jax.random.normal(kk, (batch, num_objects, dim), dtype=jnp.float32)

    out = scaled_dot_product_score(queries, keys)
    out = jax.block_until_ready(out)

    ref = jnp.einsum("bqd,bkd->bqk", queries, keys,
                     preferred_element_type=jnp.float32) / math.sqrt(dim)
    assert out.shape == (batch, num_queries, num_objects)
    assert jnp.allclose(out, ref, atol=1e-4, rtol=1e-4)

    # Second check with non-aligned sizes to exercise padding, multi-tile NK
    # and the D-reduction accumulator path.
    b2, nq2, nk2, d2 = 2, 40, 300, 300
    q2 = jax.random.normal(kq2, (b2, nq2, d2), dtype=jnp.float32)
    k2 = jax.random.normal(kk2, (b2, nk2, d2), dtype=jnp.float32)
    out2 = jax.block_until_ready(scaled_dot_product_score(q2, k2))
    ref2 = jnp.einsum("bqd,bkd->bqk", q2, k2,
                      preferred_element_type=jnp.float32) / math.sqrt(d2)
    assert out2.shape == (b2, nq2, nk2)
    assert jnp.allclose(out2, ref2, atol=1e-3, rtol=1e-3)

    print("KERNEL_OK")
</pallas_src>

<mosaic_0001>
module attributes {stable_mosaic.version = 11 : i64} {
  func.func @_sdp_score_kernel(%arg0: i32, %arg1: i32, %arg2: i32, %arg3: i32, %arg4: memref<2x8x128xf32, #tpu.memory_space<vmem>>, %arg5: memref<2x128x128xf32, #tpu.memory_space<vmem>>, %arg6: memref<2x8x128xf32, #tpu.memory_space<vmem>>, %arg7: memref<2x8x128xf32, #tpu.memory_space<vmem>>) attributes {dimension_semantics = [#tpu.dimension_semantics<parallel>, #tpu.dimension_semantics<parallel>, #tpu.dimension_semantics<parallel>, #tpu.dimension_semantics<arbitrary>], iteration_bounds = array<i64: 1, 1, 1, 1>, scalar_prefetch = 0 : i64, scratch_operands = 1 : i64, tpu.core_type = #tpu.core_type<tc>, window_params = [{transform_indices = @transform_0, window_bounds = array<i64: 2, 8, 128>}, {transform_indices = @transform_1, window_bounds = array<i64: 2, 128, 128>}, {transform_indices = @transform_2, window_bounds = array<i64: 2, 8, 128>}]} {
    %c0_i32 = arith.constant 0 : i32
    %0 = arith.cmpi eq, %arg3, %c0_i32 : i32
    %1 = arith.extui %0 : i1 to i32
    %c0_i32_0 = arith.constant 0 : i32
    %2 = arith.cmpi ne, %1, %c0_i32_0 : i32
    scf.if %2 {
      %cst_15 = arith.constant 0.000000e+00 : f32
      %14 = vector.broadcast %cst_15 : f32 to vector<2x8x128xf32>
      %c0_16 = arith.constant 0 : index
      %c0_17 = arith.constant 0 : index
      %c0_18 = arith.constant 0 : index
      %15 = vector.load %arg7[%c0_16, %c0_17, %c0_18] : memref<2x8x128xf32, #tpu.memory_space<vmem>>, vector<2x8x128xf32>
      tpu.vector_store %arg7[%c0_16, %c0_17, %c0_18], %14 {strides = array<i32>} : memref<2x8x128xf32, #tpu.memory_space<vmem>>, vector<2x8x128xf32>,
    } else {
    }
    %c0 = arith.constant 0 : index
    %c0_1 = arith.constant 0 : index
    %c0_2 = arith.constant 0 : index
    %3 = vector.load %arg4[%c0, %c0_1, %c0_2] : memref<2x8x128xf32, #tpu.memory_space<vmem>>, vector<2x8x128xf32>
    %cst = arith.constant 0.176776692 : f32
    %4 = vector.broadcast %cst : f32 to vector<2x8x128xf32>
    %5 = arith.mulf %3, %4 : vector<2x8x128xf32>
    %c0_3 = arith.constant 0 : index
    %c0_4 = arith.constant 0 : index
    %c0_5 = arith.constant 0 : index
    %6 = vector.load %arg5[%c0_3, %c0_4, %c0_5] : memref<2x128x128xf32, #tpu.memory_space<vmem>>, vector<2x128x128xf32>
    %c0_6 = arith.constant 0 : index
    %c0_7 = arith.constant 0 : index
    %c0_8 = arith.constant 0 : index
    %7 = vector.load %arg7[%c0_6, %c0_7, %c0_8] : memref<2x8x128xf32, #tpu.memory_space<vmem>>, vector<2x8x128xf32>
    %cst_9 = arith.constant dense<0.000000e+00> : vector<2x8x128xf32>
    %8 = tpu.matmul %5, %6, %cst_9 {dimension_numbers = #tpu.dot_dimension_numbers<[2], [2], [1], [1], [0, 0, 0, 1, 1, 1], [0], [0]>} : vector<2x8x128xf32>, vector<2x128x128xf32>, vector<2x8x128xf32> -> vector<2x8x128xf32>
    %9 = arith.addf %7, %8 : vector<2x8x128xf32>
    %c0_10 = arith.constant 0 : index
    %c0_11 = arith.constant 0 : index
    %c0_12 = arith.constant 0 : index
    %10 = vector.load %arg7[%c0_10, %c0_11, %c0_12] : memref<2x8x128xf32, #tpu.memory_space<vmem>>, vector<2x8x128xf32>
    tpu.vector_store %arg7[%c0_10, %c0_11, %c0_12], %9 {strides = array<i32>} : memref<2x8x128xf32, #tpu.memory_space<vmem>>, vector<2x8x128xf32>,
    %c0_i32_13 = arith.constant 0 : i32
    %11 = arith.cmpi eq, %arg3, %c0_i32_13 : i32
    %12 = arith.extui %11 : i1 to i32
    %c0_i32_14 = arith.constant 0 : i32
    %13 = arith.cmpi ne, %12, %c0_i32_14 : i32
    scf.if %13 {
      %c0_15 = arith.constant 0 : index
      %c0_16 = arith.constant 0 : index
      %c0_17 = arith.constant 0 : index
      %14 = vector.load %arg7[%c0_15, %c0_16, %c0_17] : memref<2x8x128xf32, #tpu.memory_space<vmem>>, vector<2x8x128xf32>
      %c0_18 = arith.constant 0 : index
      %c0_19 = arith.constant 0 : index
      %c0_20 = arith.constant 0 : index
      %15 = vector.load %arg6[%c0_18, %c0_19, %c0_20] : memref<2x8x128xf32, #tpu.memory_space<vmem>>, vector<2x8x128xf32>
      tpu.vector_store %arg6[%c0_18, %c0_19, %c0_20], %14 {strides = array<i32>} : memref<2x8x128xf32, #tpu.memory_space<vmem>>, vector<2x8x128xf32>,
    } else {
    }
    return
  }
  func.func @transform_0(%arg0: i32, %arg1: i32, %arg2: i32, %arg3: i32) -> (i32, i32, i32) {
    %c0_i32 = arith.constant 0 : i32
    return %arg0, %arg1, %arg3 : i32, i32, i32
  }
  func.func @transform_1(%arg0: i32, %arg1: i32, %arg2: i32, %arg3: i32) -> (i32, i32, i32) {
    %c0_i32 = arith.constant 0 : i32
    return %arg0, %arg2, %arg3 : i32, i32, i32
  }
  func.func @transform_2(%arg0: i32, %arg1: i32, %arg2: i32, %arg3: i32) -> (i32, i32, i32) {
    %c0_i32 = arith.constant 0 : i32
    return %arg0, %arg1, %arg2 : i32, i32, i32
  }
}

</mosaic_0001>

<llo_original>
// kernel: tpu_custom_call.1
$region0: #{tpu_custom_call.1}
  #allocation0 [shape = 'u32[]', space=smem, size = 0x4, offset = 0x4, fixed_abs, tag = 'smem constant byte address 0x4 - core index']
  #allocation1 [shape = 'u32[144,128]{1,0:T(1,128)}', space=vmem, size = 0x12000, scoped, tag = 'internal scratch']
  #allocation2 [shape = 'f32[2,8,128]{2,1,0:T(8,128)}', space=vmem, size = 0x2000, scoped, tag = 'scratch operand']
  %s0 = inlined_call_operand.hbm [shape: f32[2,8,128], index: 0, kind: input, shape index: {}]
  %s1 = inlined_call_operand.hbm [shape: f32[2,128,128], index: 1, kind: input, shape index: {}]
  %s2 = inlined_call_operand.hbm [shape: f32[2,8,128], index: 2, kind: output, shape index: {}]
  %s3 = sld [smem:[#allocation0]]
  $region34: #{tpu_custom_call.1} parent=0
    _
  %s5 = ssub.s32 1, %s3
  %s6 = scalar_select 0, %s5, %s3
  $region1: #{tpu_custom_call.1} parent=0
    #allocation3 [shape = 'u8[8192]{0}', space=vmem, size = 0x2000, scoped, tag = 'input window, operand 0, single buffered']
    #allocation4 [shape = 's32[1]{0}', space=sflag, size = 0x4, scoped, tag = 'scoped memory for tpu_custom_call.1']
    #allocation5 [shape = 's32[1]{0}', space=sflag, size = 0x4, scoped, tag = 'scoped memory for tpu_custom_call.1']
    #allocation6 [shape = 'u8[131072]{0}', space=vmem, size = 0x20000, scoped, tag = 'input window, operand 1, single buffered']
    #allocation7 [shape = 's32[1]{0}', space=sflag, size = 0x4, scoped, tag = 'scoped memory for tpu_custom_call.1']
    #allocation8 [shape = 'u8[8192]{0}', space=vmem, size = 0x2000, scoped, tag = 'output window, operand 0, single buffered']
    %7 = vsyncpa [#allocation4], 0
    %8 = vsyncpa [#allocation7], 0
    %9 = vsyncpa [#allocation5], 0
    // Predicated region
    $region2: #{tpu_custom_call.1} parent=1 // pred_check
      _
    $region3: #{tpu_custom_call.1} parent=1 // pred_check_branch
      %11 = sbr.rel (0) target = $region5
    $region4: #{tpu_custom_call.1} parent=1 // pred_region
      %s13 = ssub.s32 256, 256
      %14 = vsyncadd [#allocation4], %s13
      %s15 = sshll.u32 [#allocation3], 4
      %s16 = int_to_ptr.vmem [resolvable:$true] %s15
      %21 = dma.hbm_to_vmem [thread:$0]  %s0, 256, %s16, [#allocation4], 128, 128, 8
    $region5: #{tpu_custom_call.1} parent=1 // pred_fallthru
      _
    // Predicated region
    $region6: #{tpu_custom_call.1} parent=1 // pred_check
      _
    $region7: #{tpu_custom_call.1} parent=1 // pred_check_branch
      %23 = sbr.rel (0) target = $region9
    $region8: #{tpu_custom_call.1} parent=1 // pred_region
      %s25 = ssub.s32 4096, 4096
      %26 = vsyncadd [#allocation7], %s25
      %s27 = sshll.u32 [#allocation6], 4
      %s28 = int_to_ptr.vmem [resolvable:$true] %s27
      %33 = dma.hbm_to_vmem [thread:$0]  %s1, 4096, %s28, [#allocation7], 128, 128, 8
    $region9: #{tpu_custom_call.1} parent=1 // pred_fallthru
      _
    // Predicated region
    $region10: #{tpu_custom_call.1} parent=1 // pred_check
      _
    $region11: #{tpu_custom_call.1} parent=1 // pred_check_branch
      %35 = sbr.rel (0) target = $region13
    $region12: #{tpu_custom_call.1} parent=1 // pred_region
      %36 = dma.done [#allocation4], 256
    $region13: #{tpu_custom_call.1} parent=1 // pred_fallthru
      _
    // Predicated region
    $region14: #{tpu_custom_call.1} parent=1 // pred_check
      _
    $region15: #{tpu_custom_call.1} parent=1 // pred_check_branch
      %38 = sbr.rel (0) target = $region17
    $region16: #{tpu_custom_call.1} parent=1 // pred_region
      %39 = dma.done [#allocation7], 4096
    $region17: #{tpu_custom_call.1} parent=1 // pred_fallthru
      _
    %p40 = scmp.eq.s32.totalorder 0, 0
    // Predicated region
    $region18: #{tpu_custom_call.1} parent=1 // pred_check
      %p41 = pneg %p40
    $region19: #{tpu_custom_call.1} parent=1 // pred_check_branch
      %43 = sbr.rel (%p41) target = $region21
    $region20: #{tpu_custom_call.1} parent=1 // pred_region
      %44 = vst [vmem:[#allocation2] sm:$0xff] 0.0
      %45 = vst [vmem:[#allocation2 + $0x8] sm:$0xff] 0.0
    $region21: #{tpu_custom_call.1} parent=1 // pred_fallthru
      _
    %v46 = vld [vmem:[#allocation3] sm:$0xff]
    %v47 = vld [vmem:[#allocation3 + $0x8] sm:$0xff]
    %v48 = vmul.f32 %v46, 0.17677669
    %v49 = vmul.f32 %v47, 0.17677669
    %v50 = vld [vmem:[#allocation6] sm:$0xff]
    %v51 = vld [vmem:[#allocation6 + $0x8] sm:$0xff]
    %v52 = vld [vmem:[#allocation6 + $0x10] sm:$0xff]
    %v53 = vld [vmem:[#allocation6 + $0x18] sm:$0xff]
    %v54 = vld [vmem:[#allocation6 + $0x20] sm:$0xff]
    %v55 = vld [vmem:[#allocation6 + $0x28] sm:$0xff]
    %v56 = vld [vmem:[#allocation6 + $0x30] sm:$0xff]
    %v57 = vld [vmem:[#allocation6 + $0x38] sm:$0xff]
    %v58 = vld [vmem:[#allocation6 + $0x40] sm:$0xff]
    %v59 = vld [vmem:[#allocation6 + $0x48] sm:$0xff]
    %v60 = vld [vmem:[#allocation6 + $0x50] sm:$0xff]
    %v61 = vld [vmem:[#allocation6 + $0x58] sm:$0xff]
    %v62 = vld [vmem:[#allocation6 + $0x60] sm:$0xff]
    %v63 = vld [vmem:[#allocation6 + $0x68] sm:$0xff]
    %v64 = vld [vmem:[#allocation6 + $0x70] sm:$0xff]
    %v65 = vld [vmem:[#allocation6 + $0x78] sm:$0xff]
    %v66 = vld [vmem:[#allocation6 + $0x80] sm:$0xff]
    %v67 = vld [vmem:[#allocation6 + $0x88] sm:$0xff]
    %v68 = vld [vmem:[#allocation6 + $0x90] sm:$0xff]
    %v69 = vld [vmem:[#allocation6 + $0x98] sm:$0xff]
    %v70 = vld [vmem:[#allocation6 + $0xa0] sm:$0xff]
    %v71 = vld [vmem:[#allocation6 + $0xa8] sm:$0xff]
    %v72 = vld [vmem:[#allocation6 + $0xb0] sm:$0xff]
    %v73 = vld [vmem:[#allocation6 + $0xb8] sm:$0xff]
    %v74 = vld [vmem:[#allocation6 + $0xc0] sm:$0xff]
    %v75 = vld [vmem:[#allocation6 + $0xc8] sm:$0xff]
    %v76 = vld [vmem:[#allocation6 + $0xd0] sm:$0xff]
    %v77 = vld [vmem:[#allocation6 + $0xd8] sm:$0xff]
    %v78 = vld [vmem:[#allocation6 + $0xe0] sm:$0xff]
    %v79 = vld [vmem:[#allocation6 + $0xe8] sm:$0xff]
    %v80 = vld [vmem:[#allocation6 + $0xf0] sm:$0xff]
    %v81 = vld [vmem:[#allocation6 + $0xf8] sm:$0xff]
    %v82 = vld [vmem:[#allocation2] sm:$0xff]
    %v83 = vld [vmem:[#allocation2 + $0x8] sm:$0xff]
    %84 = vmatprep.subr.mxu0 0.0
    %85 = vmatpush1.xpose.msra.mxu0 %v50
    %86 = vmatprep.subr.mxu0 0.0
    %87 = vmatpush1.xpose.msra.mxu0 %v51
    %88 = vmatprep.subr.mxu0 0.0
    %89 = vmatpush1.xpose.msra.mxu0 %v52
    %90 = vmatprep.subr.mxu0 0.0
    %91 = vmatpush1.xpose.msra.mxu0 %v53
    %92 = vmatprep.subr.mxu0 0.0
    %93 = vmatpush1.xpose.msra.mxu0 %v54
    %94 = vmatprep.subr.mxu0 0.0
    %95 = vmatpush1.xpose.msra.mxu0 %v55
    %96 = vmatprep.subr.mxu0 0.0
    %97 = vmatpush1.xpose.msra.mxu0 %v56
    %98 = vmatprep.subr.mxu0 0.0
    %99 = vmatpush1.xpose.msra.mxu0 %v57
    %100 = vmatprep.subr.mxu0 0.0
    %101 = vmatpush1.xpose.msra.mxu0 %v58
    %102 = vmatprep.subr.mxu0 0.0
    %103 = vmatpush1.xpose.msra.mxu0 %v59
    %104 = vmatprep.subr.mxu0 0.0
    %105 = vmatpush1.xpose.msra.mxu0 %v60
    %106 = vmatprep.subr.mxu0 0.0
    %107 = vmatpush1.xpose.msra.mxu0 %v61
    %108 = vmatprep.subr.mxu0 0.0
    %109 = vmatpush1.xpose.msra.mxu0 %v62
    %110 = vmatprep.subr.mxu0 0.0
    %111 = vmatpush1.xpose.msra.mxu0 %v63
    %112 = vmatprep.subr.mxu0 0.0
    %113 = vmatpush1.xpose.msra.mxu0 %v64
    %114 = vmatprep.subr.mxu0 0.0
    %115 = vmatpush1.xpose.msra.mxu0 %v65
    %116 = vmatprep.subr.mxu0 0.0
    %117 = vmatpush1.xpose.msra.mxu0 0.0
    %118 = vmatprep.subr.mxu0 0.0
    %119 = vmatpush1.xpose.msra.mxu0 0.0
    %120 = vmatprep.subr.mxu0 0.0
    %121 = vmatpush1.xpose.msra.mxu0 0.0
    %122 = vmatprep.subr.mxu0 0.0
    %123 = vmatpush1.xpose.msra.mxu0 0.0
    %124 = vmatprep.subr.mxu0 0.0
    %125 = vmatpush1.xpose.msra.mxu0 0.0
    %126 = vmatprep.subr.mxu0 0.0
    %127 = vmatpush1.xpose.msra.mxu0 0.0
    %128 = vmatprep.subr.mxu0 0.0
    %129 = vmatpush1.xpose.msra.mxu0 0.0
    %130 = vmatprep.subr.mxu0 0.0
    %131 = vmatpush1.xpose.msra.mxu0 0.0
    %132 = vmatprep.subr.mxu0 0.0
    %133 = vmatpush1.xpose.msra.mxu0 0.0
    %134 = vmatprep.subr.mxu0 0.0
    %135 = vmatpush1.xpose.msra.mxu0 0.0
    %136 = vmatprep.subr.mxu0 0.0
    %137 = vmatpush1.xpose.msra.mxu0 0.0
    %138 = vmatprep.subr.mxu0 0.0
    %139 = vmatpush1.xpose.msra.mxu0 0.0
    %140 = vmatprep.subr.mxu0 0.0
    %141 = vmatpush1.xpose.msra.mxu0 0.0
    %142 = vmatprep.subr.mxu0 0.0
    %143 = vmatpush1.xpose.msra.mxu0 0.0
    %144 = vmatprep.subr.mxu0 0.0
    %145 = vmatpush1.xpose.msra.mxu0 0.0
    %146 = vmatprep.subr.mxu0 0.0
    %147 = vmatpush1.xpose.msra.mxu0 0.0
    %148 = vmatprep.mubr.f32.mxu0 0.0
    %149 = vmatmul.mubr.f32.gmra.mrb[0].mxu0 %v48
    %v150 = vpop.f32.mrb[0].mxu0
    %v151 = vadd.f32 0.0, %v150
    %v152 = vpop.f32.mrb[0].mxu0
    %153 = vdwg.mxu0
    %154 = vmatprep.subr.mxu0 0.0
    %155 = vmatpush1.xpose.msra.mxu0 %v66
    %156 = vmatprep.subr.mxu0 0.0
    %157 = vmatpush1.xpose.msra.mxu0 %v67
    %158 = vmatprep.subr.mxu0 0.0
    %159 = vmatpush1.xpose.msra.mxu0 %v68
    %160 = vmatprep.subr.mxu0 0.0
    %161 = vmatpush1.xpose.msra.mxu0 %v69
    %162 = vmatprep.subr.mxu0 0.0
    %163 = vmatpush1.xpose.msra.mxu0 %v70
    %164 = vmatprep.subr.mxu0 0.0
    %165 = vmatpush1.xpose.msra.mxu0 %v71
    %166 = vmatprep.subr.mxu0 0.0
    %167 = vmatpush1.xpose.msra.mxu0 %v72
    %168 = vmatprep.subr.mxu0 0.0
    %169 = vmatpush1.xpose.msra.mxu0 %v73
    %170 = vmatprep.subr.mxu0 0.0
    %171 = vmatpush1.xpose.msra.mxu0 %v74
    %172 = vmatprep.subr.mxu0 0.0
    %173 = vmatpush1.xpose.msra.mxu0 %v75
    %174 = vmatprep.subr.mxu0 0.0
    %175 = vmatpush1.xpose.msra.mxu0 %v76
    %176 = vmatprep.subr.mxu0 0.0
    %177 = vmatpush1.xpose.msra.mxu0 %v77
    %178 = vmatprep.subr.mxu0 0.0
    %179 = vmatpush1.xpose.msra.mxu0 %v78
    %180 = vmatprep.subr.mxu0 0.0
    %181 = vmatpush1.xpose.msra.mxu0 %v79
    %182 = vmatprep.subr.mxu0 0.0
    %183 = vmatpush1.xpose.msra.mxu0 %v80
    %184 = vmatprep.subr.mxu0 0.0
    %185 = vmatpush1.xpose.msra.mxu0 %v81
    %186 = vmatprep.subr.mxu0 0.0
    %187 = vmatpush1.xpose.msra.mxu0 0.0
    %188 = vmatprep.subr.mxu0 0.0
    %189 = vmatpush1.xpose.msra.mxu0 0.0
    %190 = vmatprep.subr.mxu0 0.0
    %191 = vmatpush1.xpose.msra.mxu0 0.0
    %192 = vmatprep.subr.mxu0 0.0
    %193 = vmatpush1.xpose.msra.mxu0 0.0
    %194 = vmatprep.subr.mxu0 0.0
    %195 = vmatpush1.xpose.msra.mxu0 0.0
    %196 = vmatprep.subr.mxu0 0.0
    %197 = vmatpush1.xpose.msra.mxu0 0.0
    %198 = vmatprep.subr.mxu0 0.0
    %199 = vmatpush1.xpose.msra.mxu0 0.0
    %200 = vmatprep.subr.mxu0 0.0
    %201 = vmatpush1.xpose.msra.mxu0 0.0
    %202 = vmatprep.subr.mxu0 0.0
    %203 = vmatpush1.xpose.msra.mxu0 0.0
    %204 = vmatprep.subr.mxu0 0.0
    %205 = vmatpush1.xpose.msra.mxu0 0.0
    %206 = vmatprep.subr.mxu0 0.0
    %207 = vmatpush1.xpose.msra.mxu0 0.0
    %208 = vmatprep.subr.mxu0 0.0
    %209 = vmatpush1.xpose.msra.mxu0 0.0
    %210 = vmatprep.subr.mxu0 0.0
    %211 = vmatpush1.xpose.msra.mxu0 0.0
    %212 = vmatprep.subr.mxu0 0.0
    %213 = vmatpush1.xpose.msra.mxu0 0.0
    %214 = vmatprep.subr.mxu0 0.0
    %215 = vmatpush1.xpose.msra.mxu0 0.0
    %216 = vmatprep.subr.mxu0 0.0
    %217 = vmatpush1.xpose.msra.mxu0 0.0
    %218 = vmatprep.mubr.f32.mxu0 0.0
    %219 = vmatmul.mubr.f32.gmra.mrb[0].mxu0 %v49
    %v220 = vpop.f32.mrb[0].mxu0
    %v221 = vadd.f32 0.0, %v220
    %v222 = vpop.f32.mrb[0].mxu0
    %223 = vdwg.mxu0
    %v224 = vadd.f32 %v82, %v151
    %v225 = vadd.f32 %v83, %v221
    %226 = vst [vmem:[#allocation2] sm:$0xff] %v224
    %227 = vst [vmem:[#allocation2 + $0x8] sm:$0xff] %v225
    // Predicated region
    $region22: #{tpu_custom_call.1} parent=1 // pred_check
      %p228 = pneg %p40
    $region23: #{tpu_custom_call.1} parent=1 // pred_check_branch
      %230 = sbr.rel (%p228) target = $region25
    $region24: #{tpu_custom_call.1} parent=1 // pred_region
      %v231 = vld [vmem:[#allocation2] sm:$0xff]
      %v232 = vld [vmem:[#allocation2 + $0x8] sm:$0xff]
      %233 = vst [vmem:[#allocation8] sm:$0xff] %v231
      %234 = vst [vmem:[#allocation8 + $0x8] sm:$0xff] %v232
    $region25: #{tpu_custom_call.1} parent=1 // pred_fallthru
      _
    // Predicated region
    $region26: #{tpu_custom_call.1} parent=1 // pred_check
      _
    $region27: #{tpu_custom_call.1} parent=1 // pred_check_branch
      %236 = sbr.rel (0) target = $region29
    $region28: #{tpu_custom_call.1} parent=1 // pred_region
      %s238 = ssub.s32 256, 256
      %239 = vsyncadd [#allocation5], %s238
      %s240 = sshll.u32 [#allocation8], 4
      %s241 = int_to_ptr.vmem [resolvable:$true] %s240
      %246 = dma.vmem_to_hbm [thread:$0]  %s241, 256, %s2, [#allocation5], 128, 128, 8
    $region29: #{tpu_custom_call.1} parent=1 // pred_fallthru
      _
    // Predicated region
    $region30: #{tpu_custom_call.1} parent=1 // pred_check
      _
    $region31: #{tpu_custom_call.1} parent=1 // pred_check_branch
      %248 = sbr.rel (0) target = $region33
    $region32: #{tpu_custom_call.1} parent=1 // pred_region
      %249 = dma.done [#allocation5], 256
    $region33: #{tpu_custom_call.1} parent=1 // pred_fallthru
      _
    %250 = vsyncpa [#allocation4], 1
    %251 = vsyncpa [#allocation7], 1
    %252 = vsyncpa [#allocation5], 1

</llo_original>
